<compile_context>
chip_gen: v7x
topology: tpu7x:2x2x1
jax: 0.10.0
libtpu: 0.0.40
codegen_flags: <defaults>
</compile_context>

<pallas_src>
import numpy as np
import jax
import jax.numpy as jnp
from jax import lax
from jax.experimental import pallas as pl
from jax.experimental.pallas import tpu as pltpu

L2_REG = 0.02


# ---------------------------------------------------------------------------
# Host-side pair selection (mirrors NPairLoss.get_n_pairs, deterministic RNG).
# TODO(synk): get_n_pairs stays host-side numpy — data-dependent, RNG-driven
# index construction has no clean Pallas equivalent (it is glue, not hot path).
# ---------------------------------------------------------------------------
def get_n_pairs(labels: np.ndarray, seed: int = 0):
    rng = np.random.RandomState(seed)
    n_pairs = []
    for label in sorted(set(labels.tolist())):
        label_indices = np.where(labels == label)[0]
        if len(label_indices) < 2:
            continue
        anchor, positive = rng.choice(label_indices, 2, replace=False)
        n_pairs.append([anchor, positive])
    n_pairs = np.array(n_pairs, dtype=np.int64)
    n_negatives = []
    for i in range(len(n_pairs)):
        negative = np.concatenate([n_pairs[:i, 1], n_pairs[i + 1:, 1]])
        n_negatives.append(negative)
    n_negatives = np.array(n_negatives, dtype=np.int64)
    return n_pairs, n_negatives


# ---------------------------------------------------------------------------
# Pallas kernel.
# Grid: (row blocks [parallel], contraction chunks [arbitrary]).
#   prefetch : count (SMEM int32[1])            -- true pair count n
#   inputs   : a (tm, tk), p (n_pad, tk)        -- padded anchor / positive tiles
#   output   : (8, 128) per row block: [0,0] = sum_i log(1+sum_j exp(x_ij)),
#                                       [0,1] = sum_i (|a_i|^2 + |p_i|^2)
#   scratch  : logits (tm, n_pad) f32, diag (tm,1) f32, per-row L2 (tm,1) f32
# ---------------------------------------------------------------------------
def _npair_loss_kernel(count_ref, a_ref, p_ref, out_ref,
                       logits_acc, diag_acc, l2_acc):
    i = pl.program_id(0)          # row-block index ("parallel")
    k = pl.program_id(1)          # contraction-chunk index ("arbitrary")
    nk = pl.num_programs(1)
    tm = a_ref.shape[0]
    n_pad = p_ref.shape[0]

    @pl.when(k == 0)
    def _init():
        logits_acc[...] = jnp.zeros_like(logits_acc)
        diag_acc[...] = jnp.zeros_like(diag_acc)
        l2_acc[...] = jnp.zeros_like(l2_acc)

    a = a_ref[...]                # (tm, tk)
    p = p_ref[...]                # (n_pad, tk)

    # MXU: contract the last dims directly (no transpose of P), f32 accumulate.
    logits_acc[...] += lax.dot_general(
        a, p, dimension_numbers=(((1,), (1,)), ((), ())),
        preferred_element_type=jnp.float32)

    # VPU work the scheduler hides under the matmul: row-matched slice of P
    # gives diag_i = a_i . p_i and the per-row L2 partial sums.
    row_start = pl.multiple_of(i * tm, tm)
    a32 = a.astype(jnp.float32)
    p32 = p_ref[pl.ds(row_start, tm), :].astype(jnp.float32)
    diag_acc[...] += jnp.sum(a32 * p32, axis=1, keepdims=True)
    l2_acc[...] += jnp.sum(a32 * a32 + p32 * p32, axis=1, keepdims=True)

    @pl.when(k == nk - 1)
    def _epilogue():
        n_valid = count_ref[0]
        row_ids = lax.broadcasted_iota(jnp.int32, (tm, 1), 0) + i * tm
        col_ids = lax.broadcasted_iota(jnp.int32, (1, n_pad), 1)
        valid = ((row_ids < n_valid) & (col_ids < n_valid)
                 & (row_ids != col_ids))

        # x[i, j] = a_i.(p_j - p_i); single -inf mask (exp(-inf) = 0).
        x = jnp.where(valid, logits_acc[...] - diag_acc[...], -jnp.inf)
        # Stabilized log(1 + sum_j exp(x_ij)); padded rows come out exactly 0.
        m = jnp.maximum(jnp.max(x, axis=1, keepdims=True), 0.0)
        s = jnp.sum(jnp.exp(x - m), axis=1, keepdims=True)
        per_row = m + jnp.log(jnp.exp(-m) + s)                     # (tm, 1)

        npair_partial = jnp.sum(per_row, axis=0, keepdims=True)    # (1, 1)
        l2_partial = jnp.sum(l2_acc[...], axis=0, keepdims=True)   # (1, 1)

        lane = lax.broadcasted_iota(jnp.int32, (8, 128), 1)
        out_ref[...] = jnp.where(
            lane == 0, npair_partial,
            jnp.where(lane == 1, l2_partial, jnp.float32(0.0)))


# ---------------------------------------------------------------------------
# Wrapper
# ---------------------------------------------------------------------------
def _round_up(x, m):
    return ((x + m - 1) // m) * m


def _largest_aligned_divisor(x, cap, step):
    """Largest multiple of `step` that divides `x` and is <= cap."""
    t = (min(cap, x) // step) * step
    while t > step and x % t:
        t -= step
    return max(t, step)


def _pad_to(x, n_pad, d_pad, dtype):
    n, d = x.shape
    x = x.astype(dtype)
    if n == n_pad and d == d_pad:
        return x                     # aligned fast path: no extra HBM copy
    return jnp.pad(x, ((0, n_pad - n), (0, d_pad - d)))


def npair_loss_pallas(anchors, positives, max_pairs=None, use_bf16=False):
    """anchors, positives: (n, D). Returns the scalar NPair + L2_REG * L2 loss.

    max_pairs : optional static upper bound on n so the compiled kernel shape
                is independent of the per-batch label distribution.
    use_bf16  : feed the GEMM with bf16 operands (f32 accumulate) — ~3x MXU
                throughput, half the HBM/VMEM bytes, relaxed precision.
    """
    n, d = anchors.shape
    if max_pairs is not None and max_pairs < n:
        raise ValueError(f"max_pairs={max_pairs} < actual pair count n={n}")
    n_req = max_pairs if max_pairs is not None else n

    cdtype = jnp.bfloat16 if use_bf16 else jnp.float32
    sub = 16 if use_bf16 else 8
    n_pad = max(sub, _round_up(n_req, sub))
    d_pad = max(128, _round_up(d, 128))

    tm = _largest_aligned_divisor(n_pad, cap=128, step=sub)
    tk = _largest_aligned_divisor(d_pad, cap=512, step=128)
    n_blocks, k_blocks = n_pad // tm, d_pad // tk

    a = _pad_to(jnp.asarray(anchors), n_pad, d_pad, cdtype)
    p = _pad_to(jnp.asarray(positives), n_pad, d_pad, cdtype)
    count = jnp.array([n], dtype=jnp.int32)

    grid_spec = pltpu.PrefetchScalarGridSpec(
        num_scalar_prefetch=1,
        grid=(n_blocks, k_blocks),
        in_specs=[
            pl.BlockSpec((tm, tk), lambda i, k, c: (i, k)),      # anchors
            pl.BlockSpec((n_pad, tk), lambda i, k, c: (0, k)),   # positives
        ],
        out_specs=pl.BlockSpec((8, 128), lambda i, k, c: (i, 0)),
        scratch_shapes=[
            pltpu.VMEM((tm, n_pad), jnp.float32),   # logits accumulator
            pltpu.VMEM((tm, 1), jnp.float32),       # diag accumulator
            pltpu.VMEM((tm, 1), jnp.float32),       # per-row L2 accumulator
        ],
    )

    item = jnp.dtype(cdtype).itemsize
    footprint = (2 * (tm * tk + n_pad * tk) * item      # double-buffered inputs
                 + (tm * n_pad + 2 * tm) * 4            # scratch
                 + 2 * 8 * 128 * 4)                     # output tile
    vmem_limit = int(min(64 * 2 ** 20, max(32 * 2 ** 20, 2 * footprint)))

    cost = pl.CostEstimate(
        flops=2 * n_pad * n_pad * d_pad + 6 * n_pad * d_pad + 8 * n_pad * n_pad,
        transcendentals=n_pad * n_pad + 2 * n_pad,
        bytes_accessed=(a.size + n_blocks * p.size) * item
                       + n_blocks * 8 * 128 * 4 + 4,
    )

    out = pl.pallas_call(
        _npair_loss_kernel,
        out_shape=jax.ShapeDtypeStruct((n_blocks * 8, 128), jnp.float32),
        grid_spec=grid_spec,
        compiler_params=pltpu.CompilerParams(
            dimension_semantics=("parallel", "arbitrary"),
            vmem_limit_bytes=vmem_limit),
        cost_estimate=cost,
    )(count, a, p)

    # One meaningful row per row block (sublane 0): col 0 = npair partial sum,
    # col 1 = L2 partial sum.
    npair_sum = jnp.sum(out[0::8, 0])
    l2_sum = jnp.sum(out[0::8, 1])
    inv_n = jnp.float32(1.0 / n)
    return npair_sum * inv_n + jnp.float32(L2_REG) * l2_sum * inv_n


def npair_loss_forward(embeddings, target_np, seed=0, max_pairs=None,
                       use_bf16=False):
    """Full forward: returns (loss, n_pairs_count)."""
    n_pairs, _n_negatives = get_n_pairs(np.asarray(target_np), seed=seed)
    anchors = embeddings[jnp.asarray(n_pairs[:, 0])]      # (n, D)
    positives = embeddings[jnp.asarray(n_pairs[:, 1])]    # (n, D)
    loss = npair_loss_pallas(anchors, positives,
                             max_pairs=max_pairs, use_bf16=use_bf16)
    return loss, len(n_pairs)


# ---------------------------------------------------------------------------
# Reference (pure numpy, explicit negatives tensor, mirrors the PyTorch module)
# ---------------------------------------------------------------------------
def npair_loss_reference(embeddings, target_np, seed=0):
    n_pairs, n_negatives = get_n_pairs(np.asarray(target_np), seed=seed)
    e = np.asarray(embeddings, dtype=np.float32)
    a = e[n_pairs[:, 0]]
    p = e[n_pairs[:, 1]]
    neg = e[n_negatives]
    x = np.einsum("nd,nmd->nm", a, neg - p[:, None, :])
    npair = np.mean(np.log(1.0 + np.sum(np.exp(x), axis=1)))
    l2 = np.sum(a ** 2 + p ** 2) / a.shape[0]
    return npair + L2_REG * l2, len(n_pairs)


if __name__ == "__main__":
    key = jax.random.PRNGKey(0)

    # Test 1: small case. 8 embeddings, D=32; 4 classes x 2 -> 4 pairs.
    B, D = 8, 32
    emb = jax.random.normal(key, (B, D), dtype=jnp.float32)
    target = np.array([0, 0, 1, 1, 2, 2, 3, 3], dtype=np.int64)
    loss, n = npair_loss_forward(emb, target, seed=0)
    loss = jax.block_until_ready(loss)
    ref_loss, ref_n = npair_loss_reference(np.asarray(emb), target, seed=0)
    assert n == ref_n
    np.testing.assert_allclose(np.asarray(loss), ref_loss, rtol=1e-5, atol=1e-5)

    # Test 2: same inputs with a larger static max_pairs (exercises the
    # count-masked padded rows/cols path with n < padded shape).
    loss_mp, _ = npair_loss_forward(emb, target, seed=0, max_pairs=16)
    loss_mp = jax.block_until_ready(loss_mp)
    np.testing.assert_allclose(np.asarray(loss_mp), ref_loss,
                               rtol=1e-5, atol=1e-5)

    # Test 3: multi-chunk contraction grid (D=600 -> d_pad=640, tk=128 -> 5 K
    # steps) with 16 pairs. Scaled embeddings keep the unstabilized numpy
    # reference inside f32 range.
    key2 = jax.random.PRNGKey(1)
    B2, D2 = 32, 600
    emb2 = 0.1 * jax.random.normal(key2, (B2, D2), dtype=jnp.float32)
    target2 = np.repeat(np.arange(16), 2).astype(np.int64)
    loss2, n2 = npair_loss_forward(emb2, target2, seed=0)
    loss2 = jax.block_until_ready(loss2)
    ref2, ref_n2 = npair_loss_reference(np.asarray(emb2), target2, seed=0)
    assert n2 == ref_n2
    np.testing.assert_allclose(np.asarray(loss2), ref2, rtol=1e-4, atol=1e-5)

    print("KERNEL_OK")
</pallas_src>

<mosaic_0001>
module attributes {stable_mosaic.version = 11 : i64} {
  func.func @_npair_loss_kernel(%arg0: i32, %arg1: i32, %arg2: memref<1xi32, #tpu.memory_space<smem>>, %arg3: memref<8x128xf32, #tpu.memory_space<vmem>>, %arg4: memref<8x128xf32, #tpu.memory_space<vmem>>, %arg5: memref<8x128xf32, #tpu.memory_space<vmem>>, %arg6: memref<8x8xf32, #tpu.memory_space<vmem>>, %arg7: memref<8x1xf32, #tpu.memory_space<vmem>>, %arg8: memref<8x1xf32, #tpu.memory_space<vmem>>) attributes {dimension_semantics = [#tpu.dimension_semantics<parallel>, #tpu.dimension_semantics<arbitrary>], iteration_bounds = array<i64: 1, 1>, scalar_prefetch = 1 : i64, scratch_operands = 3 : i64, tpu.core_type = #tpu.core_type<tc>, window_params = [{transform_indices = @transform_0, window_bounds = array<i64: 8, 128>}, {transform_indices = @transform_1, window_bounds = array<i64: 8, 128>}, {transform_indices = @transform_2, window_bounds = array<i64: 8, 128>}]} {
    %c0_i32 = arith.constant 0 : i32
    %0 = arith.cmpi eq, %arg1, %c0_i32 : i32
    %1 = arith.extui %0 : i1 to i32
    %c0_i32_0 = arith.constant 0 : i32
    %2 = arith.cmpi ne, %1, %c0_i32_0 : i32
    scf.if %2 {
      %cst_21 = arith.constant 0.000000e+00 : f32
      %30 = vector.broadcast %cst_21 : f32 to vector<8x8xf32>
      %c0_22 = arith.constant 0 : index
      %c0_23 = arith.constant 0 : index
      %31 = vector.load %arg6[%c0_22, %c0_23] : memref<8x8xf32, #tpu.memory_space<vmem>>, vector<8x8xf32>
      tpu.vector_store %arg6[%c0_22, %c0_23], %30 {strides = array<i32>} : memref<8x8xf32, #tpu.memory_space<vmem>>, vector<8x8xf32>,
      %cst_24 = arith.constant 0.000000e+00 : f32
      %32 = vector.broadcast %cst_24 : f32 to vector<8x1xf32>
      %c0_25 = arith.constant 0 : index
      %c0_26 = arith.constant 0 : index
      %33 = vector.load %arg7[%c0_25, %c0_26] : memref<8x1xf32, #tpu.memory_space<vmem>>, vector<8x1xf32>
      tpu.vector_store %arg7[%c0_25, %c0_26], %32 {strides = array<i32>} : memref<8x1xf32, #tpu.memory_space<vmem>>, vector<8x1xf32>,
      %cst_27 = arith.constant 0.000000e+00 : f32
      %34 = vector.broadcast %cst_27 : f32 to vector<8x1xf32>
      %c0_28 = arith.constant 0 : index
      %c0_29 = arith.constant 0 : index
      %35 = vector.load %arg8[%c0_28, %c0_29] : memref<8x1xf32, #tpu.memory_space<vmem>>, vector<8x1xf32>
      tpu.vector_store %arg8[%c0_28, %c0_29], %34 {strides = array<i32>} : memref<8x1xf32, #tpu.memory_space<vmem>>, vector<8x1xf32>,
    } else {
    }
    %c0 = arith.constant 0 : index
    %c0_1 = arith.constant 0 : index
    %3 = vector.load %arg3[%c0, %c0_1] : memref<8x128xf32, #tpu.memory_space<vmem>>, vector<8x128xf32>
    %c0_2 = arith.constant 0 : index
    %c0_3 = arith.constant 0 : index
    %4 = vector.load %arg4[%c0_2, %c0_3] : memref<8x128xf32, #tpu.memory_space<vmem>>, vector<8x128xf32>
    %c0_4 = arith.constant 0 : index
    %c0_5 = arith.constant 0 : index
    %5 = vector.load %arg6[%c0_4, %c0_5] : memref<8x8xf32, #tpu.memory_space<vmem>>, vector<8x8xf32>
    %cst = arith.constant dense<0.000000e+00> : vector<8x8xf32>
    %6 = tpu.matmul %3, %4, %cst {dimension_numbers = #tpu.dot_dimension_numbers<[1], [1], [0], [0], [0, 0, 1, 0], [], []>} : vector<8x128xf32>, vector<8x128xf32>, vector<8x8xf32> -> vector<8x8xf32>
    %7 = arith.addf %5, %6 : vector<8x8xf32>
    %c0_6 = arith.constant 0 : index
    %c0_7 = arith.constant 0 : index
    %8 = vector.load %arg6[%c0_6, %c0_7] : memref<8x8xf32, #tpu.memory_space<vmem>>, vector<8x8xf32>
    tpu.vector_store %arg6[%c0_6, %c0_7], %7 {strides = array<i32>} : memref<8x8xf32, #tpu.memory_space<vmem>>, vector<8x8xf32>,
    %c8_i32 = arith.constant 8 : i32
    %9 = arith.muli %arg0, %c8_i32 : i32
    %10 = tpu.assume_multiple %9, 8 : i32
    %11 = arith.index_cast %10 : i32 to index
    %c0_8 = arith.constant 0 : index
    %12 = vector.load %arg4[%11, %c0_8] : memref<8x128xf32, #tpu.memory_space<vmem>>, vector<8x128xf32>
    %c0_9 = arith.constant 0 : index
    %c0_10 = arith.constant 0 : index
    %13 = vector.load %arg7[%c0_9, %c0_10] : memref<8x1xf32, #tpu.memory_space<vmem>>, vector<8x1xf32>
    %14 = arith.mulf %3, %12 : vector<8x128xf32>
    %cst_11 = arith.constant dense<0.000000e+00> : vector<8xf32>
    %15 = vector.multi_reduction <add>, %14, %cst_11 [1] : vector<8x128xf32> to vector<8xf32>
    %16 = vector.shape_cast %15 : vector<8xf32> to vector<8x1xf32>
    %17 = arith.addf %13, %16 : vector<8x1xf32>
    %c0_12 = arith.constant 0 : index
    %c0_13 = arith.constant 0 : index
    %18 = vector.load %arg7[%c0_12, %c0_13] : memref<8x1xf32, #tpu.memory_space<vmem>>, vector<8x1xf32>
    tpu.vector_store %arg7[%c0_12, %c0_13], %17 {strides = array<i32>} : memref<8x1xf32, #tpu.memory_space<vmem>>, vector<8x1xf32>,
    %c0_14 = arith.constant 0 : index
    %c0_15 = arith.constant 0 : index
    %19 = vector.load %arg8[%c0_14, %c0_15] : memref<8x1xf32, #tpu.memory_space<vmem>>, vector<8x1xf32>
    %20 = arith.mulf %3, %3 : vector<8x128xf32>
    %21 = arith.mulf %12, %12 : vector<8x128xf32>
    %22 = arith.addf %20, %21 : vector<8x128xf32>
    %cst_16 = arith.constant dense<0.000000e+00> : vector<8xf32>
    %23 = vector.multi_reduction <add>, %22, %cst_16 [1] : vector<8x128xf32> to vector<8xf32>
    %24 = vector.shape_cast %23 : vector<8xf32> to vector<8x1xf32>
    %25 = arith.addf %19, %24 : vector<8x1xf32>
    %c0_17 = arith.constant 0 : index
    %c0_18 = arith.constant 0 : index
    %26 = vector.load %arg8[%c0_17, %c0_18] : memref<8x1xf32, #tpu.memory_space<vmem>>, vector<8x1xf32>
    tpu.vector_store %arg8[%c0_17, %c0_18], %25 {strides = array<i32>} : memref<8x1xf32, #tpu.memory_space<vmem>>, vector<8x1xf32>,
    %c0_i32_19 = arith.constant 0 : i32
    %27 = arith.cmpi eq, %arg1, %c0_i32_19 : i32
    %28 = arith.extui %27 : i1 to i32
    %c0_i32_20 = arith.constant 0 : i32
    %29 = arith.cmpi ne, %28, %c0_i32_20 : i32
    scf.if %29 {
      %c0_21 = arith.constant 0 : index
      %30 = memref.load %arg2[%c0_21] : memref<1xi32, #tpu.memory_space<smem>>
      %31 = tpu.iota {dimensions = array<i32: 0>} : vector<8x1xi32>
      %c8_i32_22 = arith.constant 8 : i32
      %32 = arith.muli %arg0, %c8_i32_22 : i32
      %33 = vector.broadcast %32 : i32 to vector<8x1xi32>
      %34 = arith.addi %31, %33 : vector<8x1xi32>
      %35 = tpu.iota {dimensions = array<i32: 1>} : vector<1x8xi32>
      %36 = vector.broadcast %30 : i32 to vector<8x1xi32>
      %37 = arith.cmpi slt, %34, %36 : vector<8x1xi32>
      %38 = vector.broadcast %30 : i32 to vector<1x8xi32>
      %39 = arith.cmpi slt, %35, %38 : vector<1x8xi32>
      %40 = vector.broadcast %37 : vector<8x1xi1> to vector<8x8xi1>
      %41 = vector.broadcast %39 : vector<1x8xi1> to vector<8x8xi1>
      %42 = arith.andi %40, %41 : vector<8x8xi1>
      %43 = vector.broadcast %34 : vector<8x1xi32> to vector<8x8xi32>
      %44 = vector.broadcast %35 : vector<1x8xi32> to vector<8x8xi32>
      %45 = arith.cmpi ne, %43, %44 : vector<8x8xi32>
      %46 = arith.andi %42, %45 : vector<8x8xi1>
      %c0_23 = arith.constant 0 : index
      %c0_24 = arith.constant 0 : index
      %47 = vector.load %arg6[%c0_23, %c0_24] : memref<8x8xf32, #tpu.memory_space<vmem>>, vector<8x8xf32>
      %c0_25 = arith.constant 0 : index
      %c0_26 = arith.constant 0 : index
      %48 = vector.load %arg7[%c0_25, %c0_26] : memref<8x1xf32, #tpu.memory_space<vmem>>, vector<8x1xf32>
      %49 = vector.broadcast %48 : vector<8x1xf32> to vector<8x8xf32>
      %50 = arith.subf %47, %49 : vector<8x8xf32>
      %cst_27 = arith.constant 0xFF800000 : f32
      %51 = vector.broadcast %cst_27 : f32 to vector<8x8xf32>
      %52 = arith.select %46, %50, %51 : vector<8x8xi1>, vector<8x8xf32>
      %cst_28 = arith.constant dense<0xFF800000> : vector<8xf32>
      %53 = vector.multi_reduction <maximumf>, %52, %cst_28 [1] : vector<8x8xf32> to vector<8xf32>
      %54 = vector.shape_cast %53 : vector<8xf32> to vector<8x1xf32>
      %cst_29 = arith.constant 0.000000e+00 : f32
      %55 = vector.broadcast %cst_29 : f32 to vector<8x1xf32>
      %56 = arith.maximumf %54, %55 : vector<8x1xf32>
      %57 = vector.broadcast %56 : vector<8x1xf32> to vector<8x8xf32>
      %58 = arith.subf %52, %57 : vector<8x8xf32>
      %59 = math.exp %58 : vector<8x8xf32>
      %cst_30 = arith.constant dense<0.000000e+00> : vector<8xf32>
      %60 = vector.multi_reduction <add>, %59, %cst_30 [1] : vector<8x8xf32> to vector<8xf32>
      %61 = vector.shape_cast %60 : vector<8xf32> to vector<8x1xf32>
      %cst_31 = arith.constant 0.000000e+00 : f32
      %62 = vector.broadcast %cst_31 : f32 to vector<8x1xf32>
      %63 = arith.subf %62, %56 : vector<8x1xf32>
      %64 = math.exp %63 : vector<8x1xf32>
      %65 = arith.addf %64, %61 : vector<8x1xf32>
      %66 = math.log %65 : vector<8x1xf32>
      %67 = arith.addf %56, %66 : vector<8x1xf32>
      %cst_32 = arith.constant dense<0.000000e+00> : vector<1xf32>
      %68 = vector.multi_reduction <add>, %67, %cst_32 [0] : vector<8x1xf32> to vector<1xf32>
      %69 = vector.shape_cast %68 : vector<1xf32> to vector<1x1xf32>
      %c0_33 = arith.constant 0 : index
      %c0_34 = arith.constant 0 : index
      %70 = vector.load %arg8[%c0_33, %c0_34] : memref<8x1xf32, #tpu.memory_space<vmem>>, vector<8x1xf32>
      %cst_35 = arith.constant dense<0.000000e+00> : vector<1xf32>
      %71 = vector.multi_reduction <add>, %70, %cst_35 [0] : vector<8x1xf32> to vector<1xf32>
      %72 = vector.shape_cast %71 : vector<1xf32> to vector<1x1xf32>
      %73 = tpu.iota {dimensions = array<i32: 1>} : vector<8x128xi32>
      %c0_i32_36 = arith.constant 0 : i32
      %74 = vector.broadcast %c0_i32_36 : i32 to vector<8x128xi32>
      %75 = arith.cmpi eq, %73, %74 : vector<8x128xi32>
      %c1_i32 = arith.constant 1 : i32
      %76 = vector.broadcast %c1_i32 : i32 to vector<8x128xi32>
      %77 = arith.cmpi eq, %73, %76 : vector<8x128xi32>
      %cst_37 = arith.constant 0.000000e+00 : f32
      %78 = vector.shape_cast %72 : vector<1x1xf32> to vector<1x1xf32>
      %79 = vector.broadcast %78 : vector<1x1xf32> to vector<8x128xf32>
      %80 = vector.broadcast %cst_37 : f32 to vector<8x128xf32>
      %81 = arith.select %77, %79, %80 : vector<8x128xi1>, vector<8x128xf32>
      %82 = vector.shape_cast %69 : vector<1x1xf32> to vector<1x1xf32>
      %83 = vector.broadcast %82 : vector<1x1xf32> to vector<8x128xf32>
      %84 = arith.select %75, %83, %81 : vector<8x128xi1>, vector<8x128xf32>
      %c0_38 = arith.constant 0 : index
      %c0_39 = arith.constant 0 : index
      %85 = vector.load %arg5[%c0_38, %c0_39] : memref<8x128xf32, #tpu.memory_space<vmem>>, vector<8x128xf32>
      tpu.vector_store %arg5[%c0_38, %c0_39], %84 {strides = array<i32>} : memref<8x128xf32, #tpu.memory_space<vmem>>, vector<8x128xf32>,
    } else {
    }
    return
  }
  func.func @transform_0(%arg0: i32, %arg1: i32, %arg2: memref<1xi32, #tpu.memory_space<smem>>) -> (i32, i32) {
    %c0_i32 = arith.constant 0 : i32
    return %arg0, %arg1 : i32, i32
  }
  func.func @transform_1(%arg0: i32, %arg1: i32, %arg2: memref<1xi32, #tpu.memory_space<smem>>) -> (i32, i32) {
    %c0_i32 = arith.constant 0 : i32
    %c0_i32_0 = arith.constant 0 : i32
    return %c0_i32, %arg1 : i32, i32
  }
  func.func @transform_2(%arg0: i32, %arg1: i32, %arg2: memref<1xi32, #tpu.memory_space<smem>>) -> (i32, i32) {
    %c0_i32 = arith.constant 0 : i32
    %c0_i32_0 = arith.constant 0 : i32
    return %arg0, %c0_i32 : i32, i32
  }
}

</mosaic_0001>

<llo_original>
// kernel: tpu_custom_call.1
$region0: #{tpu_custom_call.1}
  #allocation0 [shape = 'u32[]', space=smem, size = 0x4, offset = 0x4, fixed_abs, tag = 'smem constant byte address 0x4 - core index']
  #allocation1 [shape = 'u32[144,128]{1,0:T(1,128)}', space=vmem, size = 0x12000, scoped, tag = 'internal scratch']
  #allocation2 [shape = 'f32[8,8]{1,0:T(8,128)}', space=vmem, size = 0x1000, scoped, tag = 'scratch operand']
  #allocation3 [shape = 'f32[8,1]{1,0:T(8,128)}', space=vmem, size = 0x1000, scoped, tag = 'scratch operand']
  #allocation4 [shape = 'f32[8,1]{1,0:T(8,128)}', space=vmem, size = 0x1000, scoped, tag = 'scratch operand']
  #allocation5 [shape = 's32[1]{0}', space=sflag, size = 0x4, scoped, tag = 'scoped memory for tpu_custom_call.1']
  #allocation6 [shape = 's32[1]{0:T(128)S(6)}', space=smem, size = 0x200, scoped, tag = 'prefetched SMEM operand 0']
  %s0 = inlined_call_operand.<no memory space> [shape: s32[1], index: 0, kind: input, shape index: {}]
  %s1 = inlined_call_operand.hbm [shape: f32[8,128], index: 1, kind: input, shape index: {}]
  %s2 = inlined_call_operand.hbm [shape: f32[8,128], index: 2, kind: input, shape index: {}]
  %s3 = inlined_call_operand.hbm [shape: f32[8,128], index: 3, kind: output, shape index: {}]
  %s4 = sld [smem:[#allocation0]]
  $region34: #{tpu_custom_call.1} parent=0
    _
  %s6 = ssub.s32 1, %s4
  %s7 = scalar_select 0, %s6, %s4
  %8 = sst [smem:[#allocation6]] %s0
  $region1: #{tpu_custom_call.1} parent=0
    #allocation7 [shape = 'u8[4096]{0}', space=vmem, size = 0x1000, scoped, tag = 'input window, operand 1, single buffered']
    #allocation8 [shape = 's32[1]{0}', space=sflag, size = 0x4, scoped, tag = 'scoped memory for tpu_custom_call.1']
    #allocation9 [shape = 's32[1]{0}', space=sflag, size = 0x4, scoped, tag = 'scoped memory for tpu_custom_call.1']
    #allocation10 [shape = 'u8[4096]{0}', space=vmem, size = 0x1000, scoped, tag = 'input window, operand 2, single buffered']
    #allocation11 [shape = 's32[1]{0}', space=sflag, size = 0x4, scoped, tag = 'scoped memory for tpu_custom_call.1']
    #allocation12 [shape = 'u8[4096]{0}', space=vmem, size = 0x1000, scoped, tag = 'output window, operand 0, single buffered']
    %9 = vsyncpa [#allocation8], 0
    %10 = vsyncpa [#allocation11], 0
    %11 = vsyncpa [#allocation9], 0
    // Predicated region
    $region2: #{tpu_custom_call.1} parent=1 // pred_check
      _
    $region3: #{tpu_custom_call.1} parent=1 // pred_check_branch
      %13 = sbr.rel (0) target = $region5
    $region4: #{tpu_custom_call.1} parent=1 // pred_region
      %s15 = ssub.s32 128, 128
      %16 = vsyncadd [#allocation8], %s15
      %s18 = sshll.u32 [#allocation7], 4
      %s19 = int_to_ptr.vmem [resolvable:$true] %s18
      %21 = dma.hbm_to_vmem [thread:$0]  %s1, 128, %s19, [#allocation8]
    $region5: #{tpu_custom_call.1} parent=1 // pred_fallthru
      _
    // Predicated region
    $region6: #{tpu_custom_call.1} parent=1 // pred_check
      _
    $region7: #{tpu_custom_call.1} parent=1 // pred_check_branch
      %23 = sbr.rel (0) target = $region9
    $region8: #{tpu_custom_call.1} parent=1 // pred_region
      %s25 = ssub.s32 128, 128
      %26 = vsyncadd [#allocation11], %s25
      %s28 = sshll.u32 [#allocation10], 4
      %s29 = int_to_ptr.vmem [resolvable:$true] %s28
      %31 = dma.hbm_to_vmem [thread:$0]  %s2, 128, %s29, [#allocation11]
    $region9: #{tpu_custom_call.1} parent=1 // pred_fallthru
      _
    // Predicated region
    $region10: #{tpu_custom_call.1} parent=1 // pred_check
      _
    $region11: #{tpu_custom_call.1} parent=1 // pred_check_branch
      %33 = sbr.rel (0) target = $region13
    $region12: #{tpu_custom_call.1} parent=1 // pred_region
      %34 = dma.done [#allocation8], 128
    $region13: #{tpu_custom_call.1} parent=1 // pred_fallthru
      _
    // Predicated region
    $region14: #{tpu_custom_call.1} parent=1 // pred_check
      _
    $region15: #{tpu_custom_call.1} parent=1 // pred_check_branch
      %36 = sbr.rel (0) target = $region17
    $region16: #{tpu_custom_call.1} parent=1 // pred_region
      %37 = dma.done [#allocation11], 128
    $region17: #{tpu_custom_call.1} parent=1 // pred_fallthru
      _
    %p38 = scmp.eq.s32.totalorder 0, 0
    // Predicated region
    $region18: #{tpu_custom_call.1} parent=1 // pred_check
      %p39 = pneg %p38
    $region19: #{tpu_custom_call.1} parent=1 // pred_check_branch
      %41 = sbr.rel (%p39) target = $region21
    $region20: #{tpu_custom_call.1} parent=1 // pred_region
      %vm42 = vcmask 64512
      %43 = vst.msk [vmem:[#allocation2] sm:$0xff] %vm42, 0.0
      %vm44 = vcmask 7168
      %45 = vst.msk [vmem:[#allocation3] sm:$0xff] %vm44, 0.0
      %46 = vst.msk [vmem:[#allocation4] sm:$0xff] %vm44, 0.0
    $region21: #{tpu_custom_call.1} parent=1 // pred_fallthru
      _
    %v47 = vld [vmem:[#allocation7] sm:$0xff]
    %v48 = vld [vmem:[#allocation10] sm:$0xff]
    %v49 = vld [vmem:[#allocation2] sm:$0xff]
    %50 = vmatprep.subr.mxu0 0.0
    %51 = vmatpush1.xpose.msra.mxu0 %v48
    %52 = vmatprep.subr.mxu0 0.0
    %53 = vmatpush1.xpose.msra.mxu0 0.0
    %54 = vmatprep.subr.mxu0 0.0
    %55 = vmatpush1.xpose.msra.mxu0 0.0
    %56 = vmatprep.subr.mxu0 0.0
    %57 = vmatpush1.xpose.msra.mxu0 0.0
    %58 = vmatprep.subr.mxu0 0.0
    %59 = vmatpush1.xpose.msra.mxu0 0.0
    %60 = vmatprep.subr.mxu0 0.0
    %61 = vmatpush1.xpose.msra.mxu0 0.0
    %62 = vmatprep.subr.mxu0 0.0
    %63 = vmatpush1.xpose.msra.mxu0 0.0
    %64 = vmatprep.subr.mxu0 0.0
    %65 = vmatpush1.xpose.msra.mxu0 0.0
    %66 = vmatprep.subr.mxu0 0.0
    %67 = vmatpush1.xpose.msra.mxu0 0.0
    %68 = vmatprep.subr.mxu0 0.0
    %69 = vmatpush1.xpose.msra.mxu0 0.0
    %70 = vmatprep.subr.mxu0 0.0
    %71 = vmatpush1.xpose.msra.mxu0 0.0
    %72 = vmatprep.subr.mxu0 0.0
    %73 = vmatpush1.xpose.msra.mxu0 0.0
    %74 = vmatprep.subr.mxu0 0.0
    %75 = vmatpush1.xpose.msra.mxu0 0.0
    %76 = vmatprep.subr.mxu0 0.0
    %77 = vmatpush1.xpose.msra.mxu0 0.0
    %78 = vmatprep.subr.mxu0 0.0
    %79 = vmatpush1.xpose.msra.mxu0 0.0
    %80 = vmatprep.subr.mxu0 0.0
    %81 = vmatpush1.xpose.msra.mxu0 0.0
    %82 = vmatprep.subr.mxu0 0.0
    %83 = vmatpush1.xpose.msra.mxu0 0.0
    %84 = vmatprep.subr.mxu0 0.0
    %85 = vmatpush1.xpose.msra.mxu0 0.0
    %86 = vmatprep.subr.mxu0 0.0
    %87 = vmatpush1.xpose.msra.mxu0 0.0
    %88 = vmatprep.subr.mxu0 0.0
    %89 = vmatpush1.xpose.msra.mxu0 0.0
    %90 = vmatprep.subr.mxu0 0.0
    %91 = vmatpush1.xpose.msra.mxu0 0.0
    %92 = vmatprep.subr.mxu0 0.0
    %93 = vmatpush1.xpose.msra.mxu0 0.0
    %94 = vmatprep.subr.mxu0 0.0
    %95 = vmatpush1.xpose.msra.mxu0 0.0
    %96 = vmatprep.subr.mxu0 0.0
    %97 = vmatpush1.xpose.msra.mxu0 0.0
    %98 = vmatprep.subr.mxu0 0.0
    %99 = vmatpush1.xpose.msra.mxu0 0.0
    %100 = vmatprep.subr.mxu0 0.0
    %101 = vmatpush1.xpose.msra.mxu0 0.0
    %102 = vmatprep.subr.mxu0 0.0
    %103 = vmatpush1.xpose.msra.mxu0 0.0
    %104 = vmatprep.subr.mxu0 0.0
    %105 = vmatpush1.xpose.msra.mxu0 0.0
    %106 = vmatprep.subr.mxu0 0.0
    %107 = vmatpush1.xpose.msra.mxu0 0.0
    %108 = vmatprep.subr.mxu0 0.0
    %109 = vmatpush1.xpose.msra.mxu0 0.0
    %110 = vmatprep.subr.mxu0 0.0
    %111 = vmatpush1.xpose.msra.mxu0 0.0
    %112 = vmatprep.subr.mxu0 0.0
    %113 = vmatpush1.xpose.msra.mxu0 0.0
    %114 = vmatprep.mubr.f32.mxu0 0.0
    %115 = vmatmul.mubr.f32.gmra.mrb[0].mxu0 %v47
    %v116 = vpop.f32.mrb[0].mxu0
    %v117 = vadd.f32 0.0, %v116
    %v118 = vpop.f32.mrb[0].mxu0
    %119 = vdwg.mxu0
    %v120 = vadd.f32 %v49, %v117
    %vm121 = vcmask 64512
    %122 = vst.msk [vmem:[#allocation2] sm:$0xff] %vm121, %v120
    %s123 = smul.u32 0, 8
    %s124 = scalar_lea.vmem [#allocation10], %s123
    %v125 = vld [vmem:[%s124] sm:$0xff]
    %v126 = vld [vmem:[#allocation3] sm:$0xff]
    %v127 = vmul.f32 %v47, %v125
    %128 = vadd.xlane.f32.xlu0 %v127
    %v129 = vpop.xlane.xlu0 %128
    %v130 = vadd.f32 %v126, %v129
    %vm131 = vcmask 7168
    %132 = vst.msk [vmem:[#allocation3] sm:$0xff] %vm131, %v130
    %v133 = vld [vmem:[#allocation4] sm:$0xff]
    %v134 = vmul.f32 %v47, %v47
    %v135 = vmul.f32 %v125, %v125
    %v136 = vadd.f32 %v134, %v135
    %137 = vadd.xlane.f32.xlu0 %v136
    %v138 = vpop.xlane.xlu0 %137
    %v139 = vadd.f32 %v133, %v138
    %140 = vst.msk [vmem:[#allocation4] sm:$0xff] %vm131, %v139
    // Predicated region
    $region22: #{tpu_custom_call.1} parent=1 // pred_check
      %p141 = pneg %p38
    $region23: #{tpu_custom_call.1} parent=1 // pred_check_branch
      %143 = sbr.rel (%p141) target = $region25
    $region24: #{tpu_custom_call.1} parent=1 // pred_region
      %s144 = sld [smem:[#allocation6]]
      %v145 = vlaneseq
      %v146 = vshrl.u32 %v145, 7
      %v147 = vstv %s123
      %v148 = vadd.s32 %v146, %v147
      %v149 = vlaneseq
      %v150 = vand.u32 %v149, 127
      %v151 = vstv %s144
      %vm152 = vcmp.lt.s32.totalorder %v148, %v151
      %vm153 = vcmp.lt.s32.totalorder %v150, %v151
      %v154 = vsel %vm152, 1, 0
      %vm155 = vcmp.eq.s32.totalorder %v154, 1
      %v156 = vsel %vm153, 1, 0
      %vm157 = vcmp.eq.s32.totalorder %v156, 1
      %vm158 = vmand %vm155, %vm157
      %vm159 = vcmp.ne.s32.totalorder %v148, %v150
      %vm160 = vmand %vm158, %vm159
      %v161 = vld [vmem:[#allocation2] sm:$0xff]
      %v162 = vld [vmem:[#allocation3] sm:$0xff]
      %164 = vset.pattern.permute.xlu0 0
      %165 = vperm.xlu0 %164, %v162
      %v166 = vpop.permute.xlu0 %165
      %v168 = vsub.f32 %v161, %v166
      %v169 = vsel %vm160, %v168, -inf
      %v170 = vsel %vm121, %v169, -inf
      %171 = vmax.xlane.f32.xlu0 %v170
      %v172 = vpop.xlane.xlu0 %171
      %v173 = vmax.f32 %v172, 0.0
      %v174 = vsub.f32 %v169, %v173
      %v175 = vmul.f32 %v174, 1.442695
      %v176 = vpow.pop %v175
      %v177 = vsel %vm121, %v176, 0.0
      %178 = vadd.xlane.f32.xlu0 %v177
      %v179 = vpop.xlane.xlu0 %178
      %v180 = vsub.f32 0.0, %v173
      %v181 = vmul.f32 %v180, 1.442695
      %v182 = vpow.pop %v181
      %v183 = vadd.f32 %v182, %v179
      %v184 = vlog2.pop %v183
      %v185 = vmul.f32 %v184, 0.6931472
      %v186 = vadd.f32 %v173, %v185
      %v187 = vrot.slane %v186, 4
      %v188 = vadd.f32 %v186, %v187
      %v189 = vrot.slane %v188, 2
      %v190 = vadd.f32 %v188, %v189
      %v191 = vrot.slane %v190, 1
      %v192 = vadd.f32 %v190, %v191
      %v193 = vld [vmem:[#allocation4] sm:$0xff]
      %v194 = vsel %vm131, %v193, 0.0
      %v195 = vrot.slane %v194, 4
      %v196 = vadd.f32 %v194, %v195
      %v197 = vrot.slane %v196, 2
      %v198 = vadd.f32 %v196, %v197
      %v199 = vrot.slane %v198, 1
      %v200 = vadd.f32 %v198, %v199
      %vm201 = vcmp.eq.s32.totalorder %v150, 0
      %vm202 = vcmp.eq.s32.totalorder %v150, 1
      %204 = vset.pattern.permute.xlu0 0
      %205 = vperm.xlu0 %204, %v200
      %v206 = vpop.permute.xlu0 %205
      %v208 = vsel %vm202, %v206, 0.0
      %v209 = vsel %vm201, %v192, %v208
      %210 = vst [vmem:[#allocation12] sm:$0xff] %v209
    $region25: #{tpu_custom_call.1} parent=1 // pred_fallthru
      _
    // Predicated region
    $region26: #{tpu_custom_call.1} parent=1 // pred_check
      _
    $region27: #{tpu_custom_call.1} parent=1 // pred_check_branch
      %212 = sbr.rel (0) target = $region29
    $region28: #{tpu_custom_call.1} parent=1 // pred_region
      %s214 = ssub.s32 128, 128
      %215 = vsyncadd [#allocation9], %s214
      %s217 = sshll.u32 [#allocation12], 4
      %s218 = int_to_ptr.vmem [resolvable:$true] %s217
      %220 = dma.vmem_to_hbm [thread:$0]  %s218, 128, %s3, [#allocation9]
    $region29: #{tpu_custom_call.1} parent=1 // pred_fallthru
      _
    // Predicated region
    $region30: #{tpu_custom_call.1} parent=1 // pred_check
      _
    $region31: #{tpu_custom_call.1} parent=1 // pred_check_branch
      %222 = sbr.rel (0) target = $region33
    $region32: #{tpu_custom_call.1} parent=1 // pred_region
      %223 = dma.done [#allocation9], 128
    $region33: #{tpu_custom_call.1} parent=1 // pred_fallthru
      _
    %224 = vsyncpa [#allocation8], 1
    %225 = vsyncpa [#allocation11], 1
    %226 = vsyncpa [#allocation9], 1

</llo_original>
